<compile_context>
chip_gen: v7x
topology: tpu7x:2x2x1
jax: 0.10.0
libtpu: 0.0.40
codegen_flags: <defaults>
</compile_context>

<pallas_src>
import functools

import jax
import jax.numpy as jnp
from jax.experimental import pallas as pl
from jax.experimental.pallas import tpu as pltpu


def _round_up(x, m):
    return (x + m - 1) // m * m


def _vmem_capacity_bytes():
    try:
        return int(pltpu.get_tpu_info().vmem_capacity_bytes)
    except Exception:
        return 64 << 20          # conservative (v7x-sized) default


def _temporal_block_kernel(*refs, dilation, d_pad, cout_p, has_downsample,
                           compute_dtype):
    if has_downsample:
        (x_ref, w1_ref, b1_ref, w2_ref, b2_ref, bd_ref,
         out_ref, za1_c, za2_c) = refs
    else:
        (x_ref, w1_ref, b1_ref, w2_ref, b2_ref,
         out_ref, za1_c, za2_c) = refs
        bd_ref = None

    d = dilation
    l = pl.program_id(1)

    # Zero the causal carries at the start of every batch element (l == 0 means
    # "no previous tile", i.e. exactly the conv's zero padding).
    @pl.when(l == 0)
    def _():
        za1_c[...] = jnp.zeros_like(za1_c)
        za2_c[...] = jnp.zeros_like(za2_c)

    x = x_ref[...]                                    # (lt, cin_p)
    lt = x.shape[0]

    def causal_tap(za, carry_ref):
        """tap[i] = za[i - d], pulling i < d from the previous tile's carry."""
        carry = carry_ref[...]                        # prev tile's za[lt-d_pad:]
        tail = za[lt - d_pad:, :]
        carry_ref[...] = tail                         # small d_pad-row store
        if d_pad == lt:
            row = jax.lax.broadcasted_iota(jnp.int32, (lt, 1), 0)
            u = jnp.where(row < lt - d, za, carry)
        else:
            row_s = jax.lax.broadcasted_iota(jnp.int32, (d_pad, 1), 0)
            u_tail = jnp.where(row_s < d_pad - d, tail, carry)
            u = jnp.concatenate([za[: lt - d_pad, :], u_tail], axis=0)
        return pltpu.roll(u, shift=d, axis=0)

    # ---- stage 1: one fused MXU matmul  x @ [W1a | W1b | Wd] ---------------
    y1 = jnp.dot(x, w1_ref[...], preferred_element_type=jnp.float32)
    za1 = y1[:, :cout_p]                              # tap t - d
    zb1 = y1[:, cout_p:2 * cout_p]                    # tap t
    h1 = jnp.maximum(causal_tap(za1, za1_c) + zb1 + b1_ref[...], 0.0)
    # TODO(synk): nn.Dropout is identity in eval mode; training-mode stochastic
    # dropout is not implemented here.

    # ---- stage 2: one fused MXU matmul  h1 @ [W2a | W2b] -------------------
    y2 = jnp.dot(h1.astype(compute_dtype), w2_ref[...],
                 preferred_element_type=jnp.float32)
    za2 = y2[:, :cout_p]
    zb2 = y2[:, cout_p:2 * cout_p]
    h2 = jnp.maximum(causal_tap(za2, za2_c) + zb2 + b2_ref[...], 0.0)

    # ---- residual branch ----------------------------------------------------
    if has_downsample:
        res = y1[:, 2 * cout_p:3 * cout_p] + bd_ref[...]
    else:
        # NOTE: with bf16 compute the identity residual adds bf16-rounded x.
        res = x.astype(jnp.float32)

    out_ref[...] = jnp.maximum(h2 + res, 0.0).astype(out_ref.dtype)


_PIPELINE_MODE_OK = None   # cache: does this jax support BlockSpec pipeline_mode?


def temporal_block_forward_blc(x_blc, params, *, dilation, l_tile=None,
                               compute_dtype=jnp.bfloat16, out_dtype=None,
                               unpad=True):
    """TemporalBlock forward on (B, L, C) activations (preferred for stacking).

    params = (w1 (Cout,Cin,2), b1 (Cout,), w2 (Cout,Cout,2), b2 (Cout,),
              wd (Cout,Cin,1) or None, bd (Cout,) or None, has_downsample)

    For stacked blocks pass unpad=False (keep the lane-padded (B, L_p, cout_p)
    activation) and out_dtype=None (== compute_dtype); slice/cast to f32 only
    once after the final block.
    """
    w1, b1, w2, b2, wd, bd, has_downsample = params
    B, L, Cin = x_blc.shape
    Cout = w1.shape[0]
    if not has_downsample:
        assert Cin == Cout, "identity residual requires n_inputs == n_outputs"
    d = int(dilation)
    assert d >= 1
    if out_dtype is None:
        out_dtype = compute_dtype

    # Lane-dense padded channel sizes; L tiled with a 16-aligned tile >= d_pad.
    cin_p = _round_up(Cin, 128)
    cout_p = _round_up(Cout, 128)
    d_pad = _round_up(d, 8)

    vmem_cap = _vmem_capacity_bytes()
    if l_tile is None:
        if cout_p <= 512 and vmem_cap >= (100 << 20):
            l_tile = 1024          # v5e/v6e (128 MiB VMEM): amortize per-step overhead
        elif cout_p >= 1024 and vmem_cap < (100 << 20):
            l_tile = 256           # v7x (64 MiB VMEM): keep 2-deep pipelining alive
        else:
            l_tile = 512
    lt = max(min(l_tile, _round_up(L, 8)), d_pad)
    lt = _round_up(lt, 16)                 # friendly to bf16 (16,128) packing
    assert lt >= d_pad, "L tile must cover the dilation window (lt >= round_up(d, 8))"
    L_p = _round_up(L, lt)
    n_l = L_p // lt

    itemsize = jnp.dtype(compute_dtype).itemsize
    out_itemsize = jnp.dtype(out_dtype).itemsize
    n1 = 3 if has_downsample else 2

    # Pad + cast inputs/weights.  Zero channel padding is exact (padded input
    # channels hit zero weight rows; padded output channels get zero weight
    # columns and zero bias and are sliced off / ignored downstream).
    x_p = jnp.pad(x_blc, ((0, 0), (0, L_p - L), (0, cin_p - Cin)))
    x_p = x_p.astype(compute_dtype)

    def prep_w(w_oik, tap, rows):
        m = jnp.transpose(w_oik[:, :, tap])                 # (Kin, Cout)
        return jnp.pad(m, ((0, rows - m.shape[0]), (0, cout_p - m.shape[1])))

    def prep_b(b):
        return jnp.pad(b, (0, cout_p - Cout)).reshape(1, cout_p).astype(jnp.float32)

    w1_cols = [prep_w(w1, 0, cin_p), prep_w(w1, 1, cin_p)]   # taps t-d, t
    if has_downsample:
        w1_cols.append(prep_w(wd, 0, cin_p))                 # 1x1 downsample
    w1f = jnp.concatenate(w1_cols, axis=1).astype(compute_dtype)   # (cin_p, n1*cout_p)
    w2f = jnp.concatenate([prep_w(w2, 0, cout_p), prep_w(w2, 1, cout_p)],
                          axis=1).astype(compute_dtype)            # (cout_p, 2*cout_p)
    b1r, b2r = prep_b(b1), prep_b(b2)

    operands = [x_p, w1f, b1r, w2f, b2r]
    if has_downsample:
        operands.append(prep_b(bd))

    small_channels = max(Cin, Cout) <= 256      # HBM-bound regime -> deeper x pipeline

    # Explicit, generation-aware VMEM budget.
    w_bytes = (n1 * cin_p + 2 * cout_p) * cout_p * itemsize
    bias_bytes = (3 if has_downsample else 2) * cout_p * 4
    est = (3 * lt * cin_p * itemsize              # x blocks (<= 3-deep)
           + 2 * lt * cout_p * out_itemsize       # out blocks (2-deep)
           + 2 * (w_bytes + bias_bytes)           # weights (worst case 2-deep)
           + 2 * d_pad * cout_p * 4               # causal carries
           + (n1 + 6) * lt * cout_p * 4)          # in-kernel f32 temporaries
    vmem_limit = int(min(max(est, 32 << 20), int(0.75 * vmem_cap)))

    kernel = functools.partial(_temporal_block_kernel,
                               dilation=d, d_pad=d_pad, cout_p=cout_p,
                               has_downsample=has_downsample,
                               compute_dtype=compute_dtype)

    def _run(use_pipeline_modes):
        def full(shape):
            kw = ({"pipeline_mode": pl.Buffered(buffer_count=1)}
                  if use_pipeline_modes else {})
            return pl.BlockSpec(shape, lambda b, l: (0,) * len(shape), **kw)

        x_kw = ({"pipeline_mode": pl.Buffered(buffer_count=3)}
                if (use_pipeline_modes and small_channels) else {})
        in_specs = [pl.BlockSpec((None, lt, cin_p), lambda b, l: (b, l, 0), **x_kw),
                    full(w1f.shape), full((1, cout_p)),
                    full(w2f.shape), full((1, cout_p))]
        if has_downsample:
            in_specs.append(full((1, cout_p)))

        out = pl.pallas_call(
            kernel,
            out_shape=jax.ShapeDtypeStruct((B, L_p, cout_p), out_dtype),
            grid=(B, n_l),
            in_specs=in_specs,
            out_specs=pl.BlockSpec((None, lt, cout_p), lambda b, l: (b, l, 0)),
            scratch_shapes=[pltpu.VMEM((d_pad, cout_p), jnp.float32),   # za1 carry
                            pltpu.VMEM((d_pad, cout_p), jnp.float32)],  # za2 carry
            compiler_params=pltpu.CompilerParams(
                dimension_semantics=("parallel", "arbitrary"),
                vmem_limit_bytes=vmem_limit),
        )(*operands)
        return jax.block_until_ready(out)

    global _PIPELINE_MODE_OK
    if _PIPELINE_MODE_OK is None:
        try:
            out_p = _run(True)
            _PIPELINE_MODE_OK = True
        except Exception:
            _PIPELINE_MODE_OK = False
            out_p = _run(False)
    else:
        out_p = _run(_PIPELINE_MODE_OK)

    if unpad:
        return out_p[:, :L, :Cout]
    return out_p


def temporal_block_forward(x_ncl, params, *, dilation, l_tile=None,
                           compute_dtype=jnp.bfloat16, out_dtype=None):
    """PyTorch NCL convenience wrapper.  For stacked TemporalBlocks, call
    temporal_block_forward_blc directly (unpad=False) to avoid per-block HBM
    transposes and slice copies."""
    x_blc = jnp.transpose(x_ncl, (0, 2, 1))
    out_blc = temporal_block_forward_blc(x_blc, params, dilation=dilation,
                                         l_tile=l_tile,
                                         compute_dtype=compute_dtype,
                                         out_dtype=out_dtype)
    return jnp.transpose(out_blc, (0, 2, 1))


def _weight_norm(v, g=None):
    """PyTorch weight_norm (dim=0): w = g * v / ||v|| per output channel.
    g=None uses the init value g = ||v|| (effective weight == v)."""
    norm = jnp.sqrt(jnp.sum(v * v, axis=(1, 2), keepdims=True))
    if g is None:
        g = norm
    else:
        g = jnp.reshape(g, norm.shape)
    return g * v / norm


def _reference(x_ncl, params, *, dilation, padding):
    """Pure-JAX reference mirroring the PyTorch graph (f32 throughout)."""
    w1, b1, w2, b2, wd, bd, has_downsample = params

    def conv1d(x, w, b, dil, pad):
        y = jax.lax.conv_general_dilated(
            x, w, window_strides=(1,), padding=[(pad, pad)],
            rhs_dilation=(dil,), dimension_numbers=("NCH", "OIH", "NCH"))
        return y + b[None, :, None]

    h = conv1d(x_ncl, w1, b1, dilation, padding)[:, :, :-padding]
    h = jax.nn.relu(h)
    h = conv1d(h, w2, b2, dilation, padding)[:, :, :-padding]
    h = jax.nn.relu(h)
    res = conv1d(x_ncl, wd, bd, 1, 0) if has_downsample else x_ncl
    return jax.nn.relu(h + res)


if __name__ == "__main__":
    B, Cin, Cout, L = 2, 4, 8, 16
    kernel_size = 2
    dilation = 2
    padding = (kernel_size - 1) * dilation          # causal TCN padding

    key = jax.random.PRNGKey(0)
    k = jax.random.split(key, 7)

    # weight_norm(Conv1d) parameters, init ~ N(0, 0.01) like init_weights()
    w1 = _weight_norm(0.01 * jax.random.normal(k[0], (Cout, Cin, kernel_size), jnp.float32))
    w2 = _weight_norm(0.01 * jax.random.normal(k[1], (Cout, Cout, kernel_size), jnp.float32))
    wd = 0.01 * jax.random.normal(k[2], (Cout, Cin, 1), jnp.float32)   # plain Conv1d
    b1 = 0.01 * jax.random.normal(k[3], (Cout,), jnp.float32)
    b2 = 0.01 * jax.random.normal(k[4], (Cout,), jnp.float32)
    bd = 0.01 * jax.random.normal(k[5], (Cout,), jnp.float32)

    params = (w1, b1, w2, b2, wd, bd, Cin != Cout)   # has_downsample = True
    x = jax.random.normal(k[6], (B, Cin, L), jnp.float32)
    ref = _reference(x, params, dilation=dilation, padding=padding)

    # 1) exact-precision path (f32 MXU inputs, f32 output)
    out_f32 = temporal_block_forward(x, params, dilation=dilation,
                                     compute_dtype=jnp.float32)
    out_f32 = jax.block_until_ready(out_f32)
    assert out_f32.shape == (B, Cout, L)
    assert jnp.allclose(out_f32, ref, atol=1e-5, rtol=1e-5), "f32 mismatch vs reference"

    # 2) fast path (bf16 MXU inputs, f32 accumulation, bf16 output)
    out_bf16 = temporal_block_forward(x, params, dilation=dilation,
                                      compute_dtype=jnp.bfloat16)
    out_bf16 = jax.block_until_ready(out_bf16)
    assert jnp.allclose(out_bf16.astype(jnp.float32), ref,
                        atol=5e-3, rtol=2e-2), "bf16 mismatch vs reference"

    # 3) no-downsample variant (n_inputs == n_outputs): identity residual path
    k2 = jax.random.split(k[6], 5)
    w1n = _weight_norm(0.01 * jax.random.normal(k2[0], (Cout, Cout, kernel_size), jnp.float32))
    w2n = _weight_norm(0.01 * jax.random.normal(k2[1], (Cout, Cout, kernel_size), jnp.float32))
    b1n = 0.01 * jax.random.normal(k2[2], (Cout,), jnp.float32)
    b2n = 0.01 * jax.random.normal(k2[3], (Cout,), jnp.float32)
    params_nd = (w1n, b1n, w2n, b2n, None, None, False)
    x2 = jax.random.normal(k2[4], (B, Cout, L), jnp.float32)
    ref2 = _reference(x2, params_nd, dilation=dilation, padding=padding)
    out2 = temporal_block_forward(x2, params_nd, dilation=dilation,
                                  compute_dtype=jnp.float32)
    out2 = jax.block_until_ready(out2)
    assert jnp.allclose(out2, ref2, atol=1e-5, rtol=1e-5), "no-downsample mismatch"

    print("KERNEL_OK")
</pallas_src>

<mosaic_0001>
module attributes {stable_mosaic.version = 11 : i64} {
  func.func @_temporal_block_kernel(%arg0: i32, %arg1: i32, %arg2: memref<1x16x128xf32, #tpu.memory_space<vmem>>, %arg3: memref<128x384xf32, #tpu.memory_space<vmem>>, %arg4: memref<1x128xf32, #tpu.memory_space<vmem>>, %arg5: memref<128x256xf32, #tpu.memory_space<vmem>>, %arg6: memref<1x128xf32, #tpu.memory_space<vmem>>, %arg7: memref<1x128xf32, #tpu.memory_space<vmem>>, %arg8: memref<1x16x128xf32, #tpu.memory_space<vmem>>, %arg9: memref<8x128xf32, #tpu.memory_space<vmem>>, %arg10: memref<8x128xf32, #tpu.memory_space<vmem>>) attributes {dimension_semantics = [#tpu.dimension_semantics<parallel>, #tpu.dimension_semantics<arbitrary>], iteration_bounds = array<i64: 2, 1>, scalar_prefetch = 0 : i64, scratch_operands = 2 : i64, tpu.core_type = #tpu.core_type<tc>, window_params = [{transform_indices = @transform_0, window_bounds = array<i64: 1, 16, 128>}, {pipeline_mode = #tpu.pipeline_mode<synchronous>, transform_indices = @transform_1, window_bounds = array<i64: 128, 384>}, {pipeline_mode = #tpu.pipeline_mode<synchronous>, transform_indices = @transform_2, window_bounds = array<i64: 1, 128>}, {pipeline_mode = #tpu.pipeline_mode<synchronous>, transform_indices = @transform_3, window_bounds = array<i64: 128, 256>}, {pipeline_mode = #tpu.pipeline_mode<synchronous>, transform_indices = @transform_4, window_bounds = array<i64: 1, 128>}, {pipeline_mode = #tpu.pipeline_mode<synchronous>, transform_indices = @transform_5, window_bounds = array<i64: 1, 128>}, {transform_indices = @transform_6, window_bounds = array<i64: 1, 16, 128>}]} {
    %c0_i32 = arith.constant 0 : i32
    %0 = arith.cmpi eq, %arg1, %c0_i32 : i32
    %1 = arith.extui %0 : i1 to i32
    %c0_i32_0 = arith.constant 0 : i32
    %2 = arith.cmpi ne, %1, %c0_i32_0 : i32
    scf.if %2 {
      %cst_30 = arith.constant 0.000000e+00 : f32
      %59 = vector.broadcast %cst_30 : f32 to vector<8x128xf32>
      %c0_31 = arith.constant 0 : index
      %c0_32 = arith.constant 0 : index
      %60 = vector.load %arg9[%c0_31, %c0_32] : memref<8x128xf32, #tpu.memory_space<vmem>>, vector<8x128xf32>
      tpu.vector_store %arg9[%c0_31, %c0_32], %59 {strides = array<i32>} : memref<8x128xf32, #tpu.memory_space<vmem>>, vector<8x128xf32>,
      %cst_33 = arith.constant 0.000000e+00 : f32
      %61 = vector.broadcast %cst_33 : f32 to vector<8x128xf32>
      %c0_34 = arith.constant 0 : index
      %c0_35 = arith.constant 0 : index
      %62 = vector.load %arg10[%c0_34, %c0_35] : memref<8x128xf32, #tpu.memory_space<vmem>>, vector<8x128xf32>
      tpu.vector_store %arg10[%c0_34, %c0_35], %61 {strides = array<i32>} : memref<8x128xf32, #tpu.memory_space<vmem>>, vector<8x128xf32>,
    } else {
    }
    %c0 = arith.constant 0 : index
    %c0_1 = arith.constant 0 : index
    %c0_2 = arith.constant 0 : index
    %3 = vector.load %arg2[%c0, %c0_1, %c0_2] : memref<1x16x128xf32, #tpu.memory_space<vmem>>, vector<1x16x128xf32>
    %4 = vector.shape_cast %3 : vector<1x16x128xf32> to vector<16x128xf32>
    %c0_3 = arith.constant 0 : index
    %c0_4 = arith.constant 0 : index
    %5 = vector.load %arg3[%c0_3, %c0_4] : memref<128x384xf32, #tpu.memory_space<vmem>>, vector<128x384xf32>
    %cst = arith.constant dense<0.000000e+00> : vector<16x384xf32>
    %6 = tpu.matmul %4, %5, %cst {dimension_numbers = #tpu.dot_dimension_numbers<[1], [0], [0], [1], [0, 0, 1, 1], [], []>} : vector<16x128xf32>, vector<128x384xf32>, vector<16x384xf32> -> vector<16x384xf32>
    %7 = vector.extract_strided_slice %6 {offsets = [0, 0], sizes = [16, 128], strides = [1, 1]} : vector<16x384xf32> to vector<16x128xf32>
    %8 = vector.extract_strided_slice %6 {offsets = [0, 128], sizes = [16, 128], strides = [1, 1]} : vector<16x384xf32> to vector<16x128xf32>
    %c0_5 = arith.constant 0 : index
    %c0_6 = arith.constant 0 : index
    %9 = vector.load %arg9[%c0_5, %c0_6] : memref<8x128xf32, #tpu.memory_space<vmem>>, vector<8x128xf32>
    %10 = vector.extract_strided_slice %7 {offsets = [8, 0], sizes = [8, 128], strides = [1, 1]} : vector<16x128xf32> to vector<8x128xf32>
    %c0_7 = arith.constant 0 : index
    %c0_8 = arith.constant 0 : index
    %11 = vector.load %arg9[%c0_7, %c0_8] : memref<8x128xf32, #tpu.memory_space<vmem>>, vector<8x128xf32>
    tpu.vector_store %arg9[%c0_7, %c0_8], %10 {strides = array<i32>} : memref<8x128xf32, #tpu.memory_space<vmem>>, vector<8x128xf32>,
    %12 = tpu.iota {dimensions = array<i32: 0>} : vector<8x1xi32>
    %c6_i32 = arith.constant 6 : i32
    %13 = vector.broadcast %c6_i32 : i32 to vector<8x1xi32>
    %14 = arith.cmpi slt, %12, %13 : vector<8x1xi32>
    %15 = vector.shape_cast %14 : vector<8x1xi1> to vector<8x1xi1>
    %16 = vector.broadcast %15 : vector<8x1xi1> to vector<8x128xi1>
    %17 = arith.select %16, %10, %9 : vector<8x128xi1>, vector<8x128xf32>
    %18 = vector.extract_strided_slice %7 {offsets = [0, 0], sizes = [8, 128], strides = [1, 1]} : vector<16x128xf32> to vector<8x128xf32>
    %19 = tpu.concatenate %18, %17 in 0 : vector<8x128xf32>, vector<8x128xf32> -> vector<16x128xf32>
    %c2_i32 = arith.constant 2 : i32
    %20 = tpu.dynamic_rotate %19 by %c2_i32 dim 0 : vector<16x128xf32>, i32 -> vector<16x128xf32>
    %21 = arith.addf %20, %8 : vector<16x128xf32>
    %c0_9 = arith.constant 0 : index
    %c0_10 = arith.constant 0 : index
    %22 = vector.load %arg4[%c0_9, %c0_10] : memref<1x128xf32, #tpu.memory_space<vmem>>, vector<1x128xf32>
    %23 = vector.broadcast %22 : vector<1x128xf32> to vector<16x128xf32>
    %24 = arith.addf %21, %23 : vector<16x128xf32>
    %cst_11 = arith.constant 0.000000e+00 : f32
    %25 = vector.broadcast %cst_11 : f32 to vector<16x128xf32>
    %26 = arith.maximumf %24, %25 : vector<16x128xf32>
    %c0_12 = arith.constant 0 : index
    %c0_13 = arith.constant 0 : index
    %27 = vector.load %arg5[%c0_12, %c0_13] : memref<128x256xf32, #tpu.memory_space<vmem>>, vector<128x256xf32>
    %cst_14 = arith.constant dense<0.000000e+00> : vector<16x256xf32>
    %28 = tpu.matmul %26, %27, %cst_14 {dimension_numbers = #tpu.dot_dimension_numbers<[1], [0], [0], [1], [0, 0, 1, 1], [], []>} : vector<16x128xf32>, vector<128x256xf32>, vector<16x256xf32> -> vector<16x256xf32>
    %29 = vector.extract_strided_slice %28 {offsets = [0, 0], sizes = [16, 128], strides = [1, 1]} : vector<16x256xf32> to vector<16x128xf32>
    %30 = vector.extract_strided_slice %28 {offsets = [0, 128], sizes = [16, 128], strides = [1, 1]} : vector<16x256xf32> to vector<16x128xf32>
    %c0_15 = arith.constant 0 : index
    %c0_16 = arith.constant 0 : index
    %31 = vector.load %arg10[%c0_15, %c0_16] : memref<8x128xf32, #tpu.memory_space<vmem>>, vector<8x128xf32>
    %32 = vector.extract_strided_slice %29 {offsets = [8, 0], sizes = [8, 128], strides = [1, 1]} : vector<16x128xf32> to vector<8x128xf32>
    %c0_17 = arith.constant 0 : index
    %c0_18 = arith.constant 0 : index
    %33 = vector.load %arg10[%c0_17, %c0_18] : memref<8x128xf32, #tpu.memory_space<vmem>>, vector<8x128xf32>
    tpu.vector_store %arg10[%c0_17, %c0_18], %32 {strides = array<i32>} : memref<8x128xf32, #tpu.memory_space<vmem>>, vector<8x128xf32>,
    %34 = tpu.iota {dimensions = array<i32: 0>} : vector<8x1xi32>
    %c6_i32_19 = arith.constant 6 : i32
    %35 = vector.broadcast %c6_i32_19 : i32 to vector<8x1xi32>
    %36 = arith.cmpi slt, %34, %35 : vector<8x1xi32>
    %37 = vector.shape_cast %36 : vector<8x1xi1> to vector<8x1xi1>
    %38 = vector.broadcast %37 : vector<8x1xi1> to vector<8x128xi1>
    %39 = arith.select %38, %32, %31 : vector<8x128xi1>, vector<8x128xf32>
    %40 = vector.extract_strided_slice %29 {offsets = [0, 0], sizes = [8, 128], strides = [1, 1]} : vector<16x128xf32> to vector<8x128xf32>
    %41 = tpu.concatenate %40, %39 in 0 : vector<8x128xf32>, vector<8x128xf32> -> vector<16x128xf32>
    %c2_i32_20 = arith.constant 2 : i32
    %42 = tpu.dynamic_rotate %41 by %c2_i32_20 dim 0 : vector<16x128xf32>, i32 -> vector<16x128xf32>
    %43 = arith.addf %42, %30 : vector<16x128xf32>
    %c0_21 = arith.constant 0 : index
    %c0_22 = arith.constant 0 : index
    %44 = vector.load %arg6[%c0_21, %c0_22] : memref<1x128xf32, #tpu.memory_space<vmem>>, vector<1x128xf32>
    %45 = vector.broadcast %44 : vector<1x128xf32> to vector<16x128xf32>
    %46 = arith.addf %43, %45 : vector<16x128xf32>
    %cst_23 = arith.constant 0.000000e+00 : f32
    %47 = vector.broadcast %cst_23 : f32 to vector<16x128xf32>
    %48 = arith.maximumf %46, %47 : vector<16x128xf32>
    %49 = vector.extract_strided_slice %6 {offsets = [0, 256], sizes = [16, 128], strides = [1, 1]} : vector<16x384xf32> to vector<16x128xf32>
    %c0_24 = arith.constant 0 : index
    %c0_25 = arith.constant 0 : index
    %50 = vector.load %arg7[%c0_24, %c0_25] : memref<1x128xf32, #tpu.memory_space<vmem>>, vector<1x128xf32>
    %51 = vector.broadcast %50 : vector<1x128xf32> to vector<16x128xf32>
    %52 = arith.addf %49, %51 : vector<16x128xf32>
    %53 = arith.addf %48, %52 : vector<16x128xf32>
    %cst_26 = arith.constant 0.000000e+00 : f32
    %54 = vector.broadcast %cst_26 : f32 to vector<16x128xf32>
    %55 = arith.maximumf %53, %54 : vector<16x128xf32>
    %c0_27 = arith.constant 0 : index
    %c0_28 = arith.constant 0 : index
    %c0_29 = arith.constant 0 : index
    %56 = vector.load %arg8[%c0_27, %c0_28, %c0_29] : memref<1x16x128xf32, #tpu.memory_space<vmem>>, vector<1x16x128xf32>
    %57 = vector.shape_cast %56 : vector<1x16x128xf32> to vector<16x128xf32>
    %58 = vector.shape_cast %55 : vector<16x128xf32> to vector<1x16x128xf32>
    tpu.vector_store %arg8[%c0_27, %c0_28, %c0_29], %58 {strides = array<i32>} : memref<1x16x128xf32, #tpu.memory_space<vmem>>, vector<1x16x128xf32>,
    return
  }
  func.func @transform_0(%arg0: i32, %arg1: i32) -> (i32, i32, i32) {
    %c0_i32 = arith.constant 0 : i32
    %c0_i32_0 = arith.constant 0 : i32
    return %arg0, %arg1, %c0_i32 : i32, i32, i32
  }
  func.func @transform_1(%arg0: i32, %arg1: i32) -> (i32, i32) {
    %c0_i32 = arith.constant 0 : i32
    %c0_i32_0 = arith.constant 0 : i32
    %c0_i32_1 = arith.constant 0 : i32
    return %c0_i32, %c0_i32_0 : i32, i32
  }
  func.func @transform_2(%arg0: i32, %arg1: i32) -> (i32, i32) {
    %c0_i32 = arith.constant 0 : i32
    %c0_i32_0 = arith.constant 0 : i32
    %c0_i32_1 = arith.constant 0 : i32
    return %c0_i32, %c0_i32_0 : i32, i32
  }
  func.func @transform_3(%arg0: i32, %arg1: i32) -> (i32, i32) {
    %c0_i32 = arith.constant 0 : i32
    %c0_i32_0 = arith.constant 0 : i32
    %c0_i32_1 = arith.constant 0 : i32
    return %c0_i32, %c0_i32_0 : i32, i32
  }
  func.func @transform_4(%arg0: i32, %arg1: i32) -> (i32, i32) {
    %c0_i32 = arith.constant 0 : i32
    %c0_i32_0 = arith.constant 0 : i32
    %c0_i32_1 = arith.constant 0 : i32
    return %c0_i32, %c0_i32_0 : i32, i32
  }
  func.func @transform_5(%arg0: i32, %arg1: i32) -> (i32, i32) {
    %c0_i32 = arith.constant 0 : i32
    %c0_i32_0 = arith.constant 0 : i32
    %c0_i32_1 = arith.constant 0 : i32
    return %c0_i32, %c0_i32_0 : i32, i32
  }
  func.func @transform_6(%arg0: i32, %arg1: i32) -> (i32, i32, i32) {
    %c0_i32 = arith.constant 0 : i32
    %c0_i32_0 = arith.constant 0 : i32
    return %arg0, %arg1, %c0_i32 : i32, i32, i32
  }
}

</mosaic_0001>

<llo_original>
// kernel: tpu_custom_call.1
$region0: #{tpu_custom_call.1}
  #allocation0 [shape = 'u32[]', space=smem, size = 0x4, offset = 0x4, fixed_abs, tag = 'smem constant byte address 0x4 - core index']
  #allocation1 [shape = 'u32[144,128]{1,0:T(1,128)}', space=vmem, size = 0x12000, scoped, tag = 'internal scratch']
  #allocation2 [shape = 'f32[8,128]{1,0:T(8,128)}', space=vmem, size = 0x1000, scoped, tag = 'scratch operand']
  #allocation3 [shape = 'f32[8,128]{1,0:T(8,128)}', space=vmem, size = 0x1000, scoped, tag = 'scratch operand']
  %s0 = inlined_call_operand.hbm [shape: f32[2,16,128], index: 0, kind: input, shape index: {}]
  %s1 = inlined_call_operand.hbm [shape: f32[128,384], index: 1, kind: input, shape index: {}]
  %s2 = inlined_call_operand.vmem [shape: f32[1,128], index: 2, kind: input, shape index: {}]
  %s3 = inlined_call_operand.hbm [shape: f32[128,256], index: 3, kind: input, shape index: {}]
  %s4 = inlined_call_operand.vmem [shape: f32[1,128], index: 4, kind: input, shape index: {}]
  %s5 = inlined_call_operand.vmem [shape: f32[1,128], index: 5, kind: input, shape index: {}]
  %s6 = inlined_call_operand.hbm [shape: f32[2,16,128], index: 6, kind: output, shape index: {}]
  %s7 = sld [smem:[#allocation0]]
  $region73: #{tpu_custom_call.1} parent=0
    _
  %s9 = ssub.s32 1, %s7
  %s10 = scalar_select 0, %s9, %s7
  $region1: #{tpu_custom_call.1} parent=0
    #allocation4 [shape = 'u8[16384]{0}', space=vmem, size = 0x4000, scoped, tag = 'input window, operand 0']
    #allocation5 [shape = 's32[2]{0}', space=sflag, size = 0x8, scoped, tag = 'scoped memory for tpu_custom_call.1']
    #allocation6 [shape = 's32[2]{0}', space=sflag, size = 0x8, scoped, tag = 'scoped memory for tpu_custom_call.1']
    #allocation7 [shape = 'u8[196608]{0}', space=vmem, size = 0x30000, scoped, tag = 'input window, operand 1, single buffered']
    #allocation8 [shape = 's32[1]{0}', space=sflag, size = 0x4, scoped, tag = 'scoped memory for tpu_custom_call.1']
    #allocation9 [shape = 'u8[131072]{0}', space=vmem, size = 0x20000, scoped, tag = 'input window, operand 3, single buffered']
    #allocation10 [shape = 'u8[16384]{0}', space=vmem, size = 0x4000, scoped, tag = 'output window, operand 0']
    %11 = vsyncpa [#allocation5], 0
    %s12 = scalar_lea.sflag [#allocation5], 1
    %13 = vsyncpa %s12, 0
    %14 = vsyncpa [#allocation8], 0
    %15 = vsyncpa [#allocation6], 0
    %s16 = scalar_lea.sflag [#allocation6], 1
    %17 = vsyncpa %s16, 0
    loop: start=0, step=1, limit=4
    $region2: #{tpu_custom_call.1} parent=1 // loop_pre_header
      _
    $region3: #{tpu_custom_call.1} parent=1 // loop_header
      %s19 = sphi 0, %s23
      %p20 = scmp.ge.s32.totalorder %s19, 4
      %s26 = sphi 0, %s38
      %s27 = sphi 0, %s34
      %s28 = sphi 0, %s26
      %s29 = sphi 0, %s27
      %s30 = sphi 0, %s28
      %s31 = sphi 0, %s29
      %s43 = sphi 0, %s45
      %s46 = sphi 0, %s43
      %s47 = sphi 0, %s46
      %s63 = sphi 0, %s47
      %s67 = sphi 0, %s67
      %s69 = sphi 0, %s67
      %s70 = sphi 0, %s69
      %s84 = sphi 0, %s70
      %s88 = sphi 0, %s88
      %s90 = sphi 0, %s88
      %s91 = sphi 0, %s90
      %s105 = sphi 0, %s91
      %s109 = sphi 0, %s109
      %s111 = sphi 0, %s109
      %s112 = sphi 0, %s111
      %s126 = sphi 0, %s112
      %s130 = sphi 0, %s130
      %s132 = sphi 0, %s130
      %s133 = sphi 0, %s132
      %s147 = sphi 0, %s133
      %s151 = sphi 0, %s151
      %s153 = sphi 0, %s151
      %s154 = sphi 0, %s153
      %s168 = sphi 0, %s154
      %s176 = sphi 0, %s178
      %s179 = sphi 0, %s176
      %s180 = sphi 0, %s179
      %s196 = sphi 0, %s180
    $region4: #{tpu_custom_call.1} parent=1 // loop_header_branch
      %22 = sbr.rel (%p20) target = $region8
    $region5: #{tpu_custom_call.1} parent=1 // loop_body
      %s24 = ssub.s32 %s19, 1
      %s25 = ssub.s32 %s19, 2
      %s32 = sadd.s32 1, %s27
      %p33 = scmp.ge.s32.totalorder %s32, 1
      %s34 = scalar_select %p33, 0, %s32
      %s35 = sadd.s32 1, %s26
      %s36 = scalar_select %p33, %s35, %s26
      %p37 = scmp.ge.s32.totalorder %s36, 2
      %s38 = scalar_select %p37, 0, %s36
      %s39 = ssub.s32 %s26, %s38
      %s40 = ssub.s32 %s27, %s34
      %s41 = sor.u32 %s39, %s40
      %p42 = scmp.eq.s32.totalorder %s41, 0
      %s44 = sadd.s32 %s43, 1
      %s45 = scalar_select %p42, %s43, %s44
      %p48 = pneg %p42
      %p49 = scmp.eq.s32.totalorder %s19, 1
      %p50 = por %p48, %p49
      %p51 = scmp.ne.s32.totalorder %s43, %s46
      %p52 = scmp.eq.s32.totalorder %s19, 0
      %p53 = por %p51, %p52
      %p54 = scmp.ne.s32.totalorder %s43, %s46
      %p55 = scmp.eq.s32.totalorder %s24, 1
      %p56 = por %p54, %p55
      %p57 = scmp.ne.s32.totalorder %s46, %s47
      %p58 = scmp.eq.s32.totalorder %s24, 0
      %p59 = por %p57, %p58
      %p60 = scmp.ne.s32.totalorder %s46, %s47
      %p61 = scmp.eq.s32.totalorder %s25, 1
      %p62 = por %p60, %p61
      %p64 = scmp.ne.s32.totalorder %s47, %s63
      %p65 = scmp.eq.s32.totalorder %s25, 0
      %p66 = por %p64, %p65
      %s68 = sadd.s32 %s67, 1
      %p71 = scmp.eq.s32.totalorder %s19, 1
      %p72 = scmp.ne.s32.totalorder %s67, %s69
      %p73 = scmp.eq.s32.totalorder %s19, 0
      %p74 = por %p72, %p73
      %p75 = scmp.ne.s32.totalorder %s67, %s69
      %p76 = scmp.eq.s32.totalorder %s24, 1
      %p77 = por %p75, %p76
      %p78 = scmp.ne.s32.totalorder %s69, %s70
      %p79 = scmp.eq.s32.totalorder %s24, 0
      %p80 = por %p78, %p79
      %p81 = scmp.ne.s32.totalorder %s69, %s70
      %p82 = scmp.eq.s32.totalorder %s25, 1
      %p83 = por %p81, %p82
      %p85 = scmp.ne.s32.totalorder %s70, %s84
      %p86 = scmp.eq.s32.totalorder %s25, 0
      %p87 = por %p85, %p86
      %s89 = sadd.s32 %s88, 1
      %p92 = scmp.eq.s32.totalorder %s19, 1
      %p93 = scmp.ne.s32.totalorder %s88, %s90
      %p94 = scmp.eq.s32.totalorder %s19, 0
      %p95 = por %p93, %p94
      %p96 = scmp.ne.s32.totalorder %s88, %s90
      %p97 = scmp.eq.s32.totalorder %s24, 1
      %p98 = por %p96, %p97
      %p99 = scmp.ne.s32.totalorder %s90, %s91
      %p100 = scmp.eq.s32.totalorder %s24, 0
      %p101 = por %p99, %p100
      %p102 = scmp.ne.s32.totalorder %s90, %s91
      %p103 = scmp.eq.s32.totalorder %s25, 1
      %p104 = por %p102, %p103
      %p106 = scmp.ne.s32.totalorder %s91, %s105
      %p107 = scmp.eq.s32.totalorder %s25, 0
      %p108 = por %p106, %p107
      %s110 = sadd.s32 %s109, 1
      %p113 = scmp.eq.s32.totalorder %s19, 1
      %p114 = scmp.ne.s32.totalorder %s109, %s111
      %p115 = scmp.eq.s32.totalorder %s19, 0
      %p116 = por %p114, %p115
      %p117 = scmp.ne.s32.totalorder %s109, %s111
      %p118 = scmp.eq.s32.totalorder %s24, 1
      %p119 = por %p117, %p118
      %p120 = scmp.ne.s32.totalorder %s111, %s112
      %p121 = scmp.eq.s32.totalorder %s24, 0
      %p122 = por %p120, %p121
      %p123 = scmp.ne.s32.totalorder %s111, %s112
      %p124 = scmp.eq.s32.totalorder %s25, 1
      %p125 = por %p123, %p124
      %p127 = scmp.ne.s32.totalorder %s112, %s126
      %p128 = scmp.eq.s32.totalorder %s25, 0
      %p129 = por %p127, %p128
      %s131 = sadd.s32 %s130, 1
      %p134 = scmp.eq.s32.totalorder %s19, 1
      %p135 = scmp.ne.s32.totalorder %s130, %s132
      %p136 = scmp.eq.s32.totalorder %s19, 0
      %p137 = por %p135, %p136
      %p138 = scmp.ne.s32.totalorder %s130, %s132
      %p139 = scmp.eq.s32.totalorder %s24, 1
      %p140 = por %p138, %p139
      %p141 = scmp.ne.s32.totalorder %s132, %s133
      %p142 = scmp.eq.s32.totalorder %s24, 0
      %p143 = por %p141, %p142
      %p144 = scmp.ne.s32.totalorder %s132, %s133
      %p145 = scmp.eq.s32.totalorder %s25, 1
      %p146 = por %p144, %p145
      %p148 = scmp.ne.s32.totalorder %s133, %s147
      %p149 = scmp.eq.s32.totalorder %s25, 0
      %p150 = por %p148, %p149
      %s152 = sadd.s32 %s151, 1
      %p155 = scmp.eq.s32.totalorder %s19, 1
      %p156 = scmp.ne.s32.totalorder %s151, %s153
      %p157 = scmp.eq.s32.totalorder %s19, 0
      %p158 = por %p156, %p157
      %p159 = scmp.ne.s32.totalorder %s151, %s153
      %p160 = scmp.eq.s32.totalorder %s24, 1
      %p161 = por %p159, %p160
      %p162 = scmp.ne.s32.totalorder %s153, %s154
      %p163 = scmp.eq.s32.totalorder %s24, 0
      %p164 = por %p162, %p163
      %p165 = scmp.ne.s32.totalorder %s153, %s154
      %p166 = scmp.eq.s32.totalorder %s25, 1
      %p167 = por %p165, %p166
      %p169 = scmp.ne.s32.totalorder %s154, %s168
      %p170 = scmp.eq.s32.totalorder %s25, 0
      %p171 = por %p169, %p170
      %s172 = ssub.s32 %s26, %s38
      %s173 = ssub.s32 %s27, %s34
      %s174 = sor.u32 %s172, %s173
      %p175 = scmp.eq.s32.totalorder %s174, 0
      %s177 = sadd.s32 %s176, 1
      %s178 = scalar_select %p175, %s176, %s177
      %p181 = pneg %p175
      %p182 = scmp.eq.s32.totalorder %s19, 1
      %p183 = por %p181, %p182
      %p184 = scmp.ne.s32.totalorder %s176, %s179
      %p185 = scmp.eq.s32.totalorder %s19, 0
      %p186 = por %p184, %p185
      %p187 = scmp.ne.s32.totalorder %s176, %s179
      %p188 = scmp.eq.s32.totalorder %s24, 1
      %p189 = por %p187, %p188
      %p190 = scmp.ne.s32.totalorder %s179, %s180
      %p191 = scmp.eq.s32.totalorder %s24, 0
      %p192 = por %p190, %p191
      %p193 = scmp.ne.s32.totalorder %s179, %s180
      %p194 = scmp.eq.s32.totalorder %s25, 1
      %p195 = por %p193, %p194
      %p197 = scmp.ne.s32.totalorder %s180, %s196
      %p198 = scmp.eq.s32.totalorder %s25, 0
      %p199 = por %p197, %p198
      %p200 = scmp.le.s32.totalorder 1, %s19
      %p201 = scmp.lt.s32.totalorder %s19, 3
      %p202 = pnand %p200, %p201
      %p203 = pneg %p202
      // Predicated region
      $region9: #{tpu_custom_call.1} parent=5 // pred_check
        _
      $region10: #{tpu_custom_call.1} parent=5 // pred_check_branch
        %205 = sbr.rel (%p202) target = $region12
      $region11: #{tpu_custom_call.1} parent=5 // pred_region
        %s206 = ssub.s32 %s19, 1
        // Predicated region
        $region13: #{tpu_custom_call.1} parent=11 // pred_check
          %p207 = pneg %p80
        $region14: #{tpu_custom_call.1} parent=11 // pred_check_branch
          %209 = sbr.rel (%p207) target = $region16
        $region15: #{tpu_custom_call.1} parent=11 // pred_region
          %s211 = ssub.s32 6144, 6144
          %212 = vsyncadd [#allocation8], %s211
          %s213 = sshll.u32 [#allocation7], 4
          %s214 = int_to_ptr.vmem [resolvable:$true] %s213
          %219 = dma.hbm_to_vmem [thread:$0]  %s1, 6144, %s214, [#allocation8], 384, 384, 24
        $region16: #{tpu_custom_call.1} parent=11 // pred_fallthru
          _
        // Predicated region
        $region17: #{tpu_custom_call.1} parent=11 // pred_check
          %p220 = pneg %p101
        $region18: #{tpu_custom_call.1} parent=11 // pred_check_branch
          %222 = sbr.rel (%p220) target = $region20
        $region19: #{tpu_custom_call.1} parent=11 // pred_region
          _
        $region20: #{tpu_custom_call.1} parent=11 // pred_fallthru
          _
        // Predicated region
        $region21: #{tpu_custom_call.1} parent=11 // pred_check
          %p223 = pneg %p122
        $region22: #{tpu_custom_call.1} parent=11 // pred_check_branch
          %225 = sbr.rel (%p223) target = $region24
        $region23: #{tpu_custom_call.1} parent=11 // pred_region
          %s227 = ssub.s32 4096, 4096
          %228 = vsyncadd [#allocation8], %s227
          %s229 = sshll.u32 [#allocation9], 4
          %s230 = int_to_ptr.vmem [resolvable:$true] %s229
          %235 = dma.hbm_to_vmem [thread:$0]  %s3, 4096, %s230, [#allocation8], 256, 256, 16
        $region24: #{tpu_custom_call.1} parent=11 // pred_fallthru
          _
        // Predicated region
        $region25: #{tpu_custom_call.1} parent=11 // pred_check
          %p236 = pneg %p143
        $region26: #{tpu_custom_call.1} parent=11 // pred_check_branch
          %238 = sbr.rel (%p236) target = $region28
        $region27: #{tpu_custom_call.1} parent=11 // pred_region
          _
        $region28: #{tpu_custom_call.1} parent=11 // pred_fallthru
          _
        // Predicated region
        $region29: #{tpu_custom_call.1} parent=11 // pred_check
          %p239 = pneg %p164
        $region30: #{tpu_custom_call.1} parent=11 // pred_check_branch
          %241 = sbr.rel (%p239) target = $region32
        $region31: #{tpu_custom_call.1} parent=11 // pred_region
          _
        $region32: #{tpu_custom_call.1} parent=11 // pred_fallthru
          _
      $region12: #{tpu_custom_call.1} parent=5 // pred_fallthru
        _
      %p242 = scmp.lt.s32.totalorder %s19, 2
      // Predicated region
      $region33: #{tpu_custom_call.1} parent=5 // pred_check
        %p243 = pneg %p242
      $region34: #{tpu_custom_call.1} parent=5 // pred_check_branch
        %245 = sbr.rel (%p243) target = $region36
      $region35: #{tpu_custom_call.1} parent=5 // pred_region
        // Predicated region
        $region37: #{tpu_custom_call.1} parent=35 // pred_check
          %p246 = pneg %p53
        $region38: #{tpu_custom_call.1} parent=35 // pred_check_branch
          %248 = sbr.rel (%p246) target = $region40
        $region39: #{tpu_custom_call.1} parent=35 // pred_region
          %s249 = sand.u32 %s43, 1
          %s250 = scalar_lea.sflag [#allocation5], %s249
          %s251 = sand.u32 %s43, 1
          %s252 = smul.addr %s251, 16
          %s253 = scalar_lea.vmem [#allocation4], %s252
          %s254 = smul.u32 2, %s27
          %s256 = ssub.s32 256, 256
          %257 = vsyncadd %s250, %s256
          %s258 = smul.addr %s26, 2
          %s259 = sadd.s32 %s254, %s258
          %s260 = smul.addr %s259, 128
          %s261 = scalar_lea.hbm %s0, %s260
          %s262 = sshll.u32 %s253, 4
          %s263 = int_to_ptr.vmem [resolvable:$true] %s262
          %268 = dma.hbm_to_vmem [thread:$0]  %s261, 256, %s263, %s250, 128, 128, 8
        $region40: #{tpu_custom_call.1} parent=35 // pred_fallthru
          _
      $region36: #{tpu_custom_call.1} parent=5 // pred_fallthru
        _
      %p269 = scmp.le.s32.totalorder 1, %s19
      %p270 = scmp.lt.s32.totalorder %s19, 3
      %p271 = pnand %p269, %p270
      %p272 = pneg %p271
      // Predicated region
      $region41: #{tpu_custom_call.1} parent=5 // pred_check
        _
      $region42: #{tpu_custom_call.1} parent=5 // pred_check_branch
        %274 = sbr.rel (%p271) target = $region44
      $region43: #{tpu_custom_call.1} parent=5 // pred_region
        %s275 = ssub.s32 %s19, 1
        %s276 = sand.u32 %s46, 1
        %s277 = scalar_lea.sflag [#allocation5], %s276
        %s278 = sand.u32 %s46, 1
        %s279 = smul.addr %s278, 16
        %s280 = scalar_lea.vmem [#allocation4], %s279
        // Predicated region
        $region45: #{tpu_custom_call.1} parent=43 // pred_check
          %p281 = pneg %p59
        $region46: #{tpu_custom_call.1} parent=43 // pred_check_branch
          %283 = sbr.rel (%p281) target = $region48
        $region47: #{tpu_custom_call.1} parent=43 // pred_region
          %284 = dma.done %s277, 256
        $region48: #{tpu_custom_call.1} parent=43 // pred_fallthru
          _
        // Predicated region
        $region49: #{tpu_custom_call.1} parent=43 // pred_check
          %p285 = pneg %p80
        $region50: #{tpu_custom_call.1} parent=43 // pred_check_branch
          %287 = sbr.rel (%p285) target = $region52
        $region51: #{tpu_custom_call.1} parent=43 // pred_region
          %288 = dma.done [#allocation8], 6144
        $region52: #{tpu_custom_call.1} parent=43 // pred_fallthru
          _
        // Predicated region
        $region53: #{tpu_custom_call.1} parent=43 // pred_check
          %p289 = pneg %p122
        $region54: #{tpu_custom_call.1} parent=43 // pred_check_branch
          %291 = sbr.rel (%p289) target = $region56
        $region55: #{tpu_custom_call.1} parent=43 // pred_region
          %292 = dma.done [#allocation8], 4096
        $region56: #{tpu_custom_call.1} parent=43 // pred_fallthru
          _
        %s293 = sand.u32 %s46, 1
        %s294 = scalar_lea.sflag [#allocation5], %s293
        %s295 = sand.u32 %s46, 1
        %s296 = smul.addr %s295, 16
        %s297 = scalar_lea.vmem [#allocation4], %s296
        %p298 = pneg %p59
        %p299 = pneg %p56
        %p300 = pneg %p80
        %p301 = pneg %p77
        %p302 = pneg %p101
        %p303 = pneg %p98
        %p304 = pneg %p122
        %p305 = pneg %p119
        %p306 = pneg %p143
        %p307 = pneg %p140
        %p308 = pneg %p164
        %p309 = pneg %p161
        %p310 = pneg %p192
        %p311 = pneg %p189
        %s312 = sand.u32 %s179, 1
        %s313 = scalar_lea.sflag [#allocation6], %s312
        %s314 = sand.u32 %s179, 1
        %s315 = smul.addr %s314, 16
        %s316 = scalar_lea.vmem [#allocation10], %s315
        %s317 = smul.u32 2, %s29
        %s318 = smul.u32 2, %s29
        %p319 = scmp.eq.s32.totalorder %s29, 0
        // Predicated region
        $region57: #{tpu_custom_call.1} parent=43 // pred_check
          %p320 = pneg %p319
        $region58: #{tpu_custom_call.1} parent=43 // pred_check_branch
          %322 = sbr.rel (%p320) target = $region60
        $region59: #{tpu_custom_call.1} parent=43 // pred_region
          %323 = vst [vmem:[#allocation2] sm:$0xff] 0.0
          %324 = vst [vmem:[#allocation3] sm:$0xff] 0.0
        $region60: #{tpu_custom_call.1} parent=43 // pred_fallthru
          _
        %v325 = vld [vmem:[%s280] sm:$0xff]
        %v326 = vld [vmem:[%s280 + $0x8] sm:$0xff]
        %v327 = vld [vmem:[#allocation7] sm:$0xff]
        %v328 = vld [vmem:[#allocation7 + $0x8] sm:$0xff]
        %v329 = vld [vmem:[#allocation7 + $0x10] sm:$0xff]
        %v330 = vld [vmem:[#allocation7 + $0x18] sm:$0xff]
        %v331 = vld [vmem:[#allocation7 + $0x20] sm:$0xff]
        %v332 = vld [vmem:[#allocation7 + $0x28] sm:$0xff]
        %v333 = vld [vmem:[#allocation7 + $0x30] sm:$0xff]
        %v334 = vld [vmem:[#allocation7 + $0x38] sm:$0xff]
        %v335 = vld [vmem:[#allocation7 + $0x40] sm:$0xff]
        %v336 = vld [vmem:[#allocation7 + $0x48] sm:$0xff]
        %v337 = vld [vmem:[#allocation7 + $0x50] sm:$0xff]
        %v338 = vld [vmem:[#allocation7 + $0x58] sm:$0xff]
        %v339 = vld [vmem:[#allocation7 + $0x60] sm:$0xff]
        %v340 = vld [vmem:[#allocation7 + $0x68] sm:$0xff]
        %v341 = vld [vmem:[#allocation7 + $0x70] sm:$0xff]
        %v342 = vld [vmem:[#allocation7 + $0x78] sm:$0xff]
        %v343 = vld [vmem:[#allocation7 + $0x80] sm:$0xff]
        %v344 = vld [vmem:[#allocation7 + $0x88] sm:$0xff]
        %v345 = vld [vmem:[#allocation7 + $0x90] sm:$0xff]
        %v346 = vld [vmem:[#allocation7 + $0x98] sm:$0xff]
        %v347 = vld [vmem:[#allocation7 + $0xa0] sm:$0xff]
        %v348 = vld [vmem:[#allocation7 + $0xa8] sm:$0xff]
        %v349 = vld [vmem:[#allocation7 + $0xb0] sm:$0xff]
        %v350 = vld [vmem:[#allocation7 + $0xb8] sm:$0xff]
        %v351 = vld [vmem:[#allocation7 + $0xc0] sm:$0xff]
        %v352 = vld [vmem:[#allocation7 + $0xc8] sm:$0xff]
        %v353 = vld [vmem:[#allocation7 + $0xd0] sm:$0xff]
        %v354 = vld [vmem:[#allocation7 + $0xd8] sm:$0xff]
        %v355 = vld [vmem:[#allocation7 + $0xe0] sm:$0xff]
        %v356 = vld [vmem:[#allocation7 + $0xe8] sm:$0xff]
        %v357 = vld [vmem:[#allocation7 + $0xf0] sm:$0xff]
        %v358 = vld [vmem:[#allocation7 + $0xf8] sm:$0xff]
        %v359 = vld [vmem:[#allocation7 + $0x100] sm:$0xff]
        %v360 = vld [vmem:[#allocation7 + $0x108] sm:$0xff]
        %v361 = vld [vmem:[#allocation7 + $0x110] sm:$0xff]
        %v362 = vld [vmem:[#allocation7 + $0x118] sm:$0xff]
        %v363 = vld [vmem:[#allocation7 + $0x120] sm:$0xff]
        %v364 = vld [vmem:[#allocation7 + $0x128] sm:$0xff]
        %v365 = vld [vmem:[#allocation7 + $0x130] sm:$0xff]
        %v366 = vld [vmem:[#allocation7 + $0x138] sm:$0xff]
        %v367 = vld [vmem:[#allocation7 + $0x140] sm:$0xff]
        %v368 = vld [vmem:[#allocation7 + $0x148] sm:$0xff]
        %v369 = vld [vmem:[#allocation7 + $0x150] sm:$0xff]
        %v370 = vld [vmem:[#allocation7 + $0x158] sm:$0xff]
        %v371 = vld [vmem:[#allocation7 + $0x160] sm:$0xff]
        %v372 = vld [vmem:[#allocation7 + $0x168] sm:$0xff]
        %v373 = vld [vmem:[#allocation7 + $0x170] sm:$0xff]
        %v374 = vld [vmem:[#allocation7 + $0x178] sm:$0xff]
        %375 = vmatprep.subr.mxu0 %v328
        %376 = vmatpush1.msra.mxu0 %v327
        %377 = vmatprep.subr.mxu0 %v331
        %378 = vmatpush1.msra.mxu0 %v330
        %379 = vmatprep.subr.mxu0 %v334
        %380 = vmatpush1.msra.mxu0 %v333
        %381 = vmatprep.subr.mxu0 %v337
        %382 = vmatpush1.msra.mxu0 %v336
        %383 = vmatprep.subr.mxu0 %v340
        %384 = vmatpush1.msra.mxu0 %v339
        %385 = vmatprep.subr.mxu0 %v343
        %386 = vmatpush1.msra.mxu0 %v342
        %387 = vmatprep.subr.mxu0 %v346
        %388 = vmatpush1.msra.mxu0 %v345
        %389 = vmatprep.subr.mxu0 %v349
        %390 = vmatpush1.msra.mxu0 %v348
        %391 = vmatprep.subr.mxu0 %v352
        %392 = vmatpush1.msra.mxu0 %v351
        %393 = vmatprep.subr.mxu0 %v355
        %394 = vmatpush1.msra.mxu0 %v354
        %395 = vmatprep.subr.mxu0 %v358
        %396 = vmatpush1.msra.mxu0 %v357
        %397 = vmatprep.subr.mxu0 %v361
        %398 = vmatpush1.msra.mxu0 %v360
        %399 = vmatprep.subr.mxu0 %v364
        %400 = vmatpush1.msra.mxu0 %v363
        %401 = vmatprep.subr.mxu0 %v367
        %402 = vmatpush1.msra.mxu0 %v366
        %403 = vmatprep.subr.mxu0 %v370
        %404 = vmatpush1.msra.mxu0 %v369
        %405 = vmatprep.subr.mxu0 %v373
        %406 = vmatpush1.msra.mxu0 %v372
        %407 = vmatprep.subr.mxu0 0.0
        %408 = vmatpush1.msra.mxu0 0.0
        %409 = vmatprep.subr.mxu0 0.0
        %410 = vmatpush1.msra.mxu0 0.0
        %411 = vmatprep.subr.mxu0 0.0
        %412 = vmatpush1.msra.mxu0 0.0
        %413 = vmatprep.subr.mxu0 0.0
        %414 = vmatpush1.msra.mxu0 0.0
        %415 = vmatprep.subr.mxu0 0.0
        %416 = vmatpush1.msra.mxu0 0.0
        %417 = vmatprep.subr.mxu0 0.0
        %418 = vmatpush1.msra.mxu0 0.0
        %419 = vmatprep.subr.mxu0 0.0
        %420 = vmatpush1.msra.mxu0 0.0
        %421 = vmatprep.subr.mxu0 0.0
        %422 = vmatpush1.msra.mxu0 0.0
        %423 = vmatprep.subr.mxu0 0.0
        %424 = vmatpush1.msra.mxu0 0.0
        %425 = vmatprep.subr.mxu0 0.0
        %426 = vmatpush1.msra.mxu0 0.0
        %427 = vmatprep.subr.mxu0 0.0
        %428 = vmatpush1.msra.mxu0 0.0
        %429 = vmatprep.subr.mxu0 0.0
        %430 = vmatpush1.msra.mxu0 0.0
        %431 = vmatprep.subr.mxu0 0.0
        %432 = vmatpush1.msra.mxu0 0.0
        %433 = vmatprep.subr.mxu0 0.0
        %434 = vmatpush1.msra.mxu0 0.0
        %435 = vmatprep.subr.mxu0 0.0
        %436 = vmatpush1.msra.mxu0 0.0
        %437 = vmatprep.subr.mxu0 0.0
        %438 = vmatpush1.msra.mxu0 0.0
        %439 = vmatprep.mubr.f32.mxu0 0.0
        %440 = vmatmul.mubr.f32.gmra.mrb[0].mxu0 %v325
        %v441 = vpop.f32.mrb[0].mxu0
        %v442 = vadd.f32 0.0, %v441
        %v443 = vpop.f32.mrb[0].mxu0
        %v444 = vadd.f32 0.0, %v443
        %445 = vmatprep.mubr.f32.mxu0 0.0
        %446 = vmatmul.mubr.f32.gmra.mrb[0].mxu0 %v326
        %v447 = vpop.f32.mrb[0].mxu0
        %v448 = vadd.f32 0.0, %v447
        %v449 = vpop.f32.mrb[0].mxu0
        %v450 = vadd.f32 0.0, %v449
        %451 = vdwg.mxu0
        %452 = vmatprep.subr.mxu0 0.0
        %453 = vmatpush1.msra.mxu0 %v329
        %454 = vmatprep.subr.mxu0 0.0
        %455 = vmatpush1.msra.mxu0 %v332
        %456 = vmatprep.subr.mxu0 0.0
        %457 = vmatpush1.msra.mxu0 %v335
        %458 = vmatprep.subr.mxu0 0.0
        %459 = vmatpush1.msra.mxu0 %v338
        %460 = vmatprep.subr.mxu0 0.0
        %461 = vmatpush1.msra.mxu0 %v341
        %462 = vmatprep.subr.mxu0 0.0
        %463 = vmatpush1.msra.mxu0 %v344
        %464 = vmatprep.subr.mxu0 0.0
        %465 = vmatpush1.msra.mxu0 %v347
        %466 = vmatprep.subr.mxu0 0.0
        %467 = vmatpush1.msra.mxu0 %v350
        %468 = vmatprep.subr.mxu0 0.0
        %469 = vmatpush1.msra.mxu0 %v353
        %470 = vmatprep.subr.mxu0 0.0
        %471 = vmatpush1.msra.mxu0 %v356
        %472 = vmatprep.subr.mxu0 0.0
        %473 = vmatpush1.msra.mxu0 %v359
        %474 = vmatprep.subr.mxu0 0.0
        %475 = vmatpush1.msra.mxu0 %v362
        %476 = vmatprep.subr.mxu0 0.0
        %477 = vmatpush1.msra.mxu0 %v365
        %478 = vmatprep.subr.mxu0 0.0
        %479 = vmatpush1.msra.mxu0 %v368
        %480 = vmatprep.subr.mxu0 0.0
        %481 = vmatpush1.msra.mxu0 %v371
        %482 = vmatprep.subr.mxu0 0.0
        %483 = vmatpush1.msra.mxu0 %v374
        %484 = vmatprep.subr.mxu0 0.0
        %485 = vmatpush1.msra.mxu0 0.0
        %486 = vmatprep.subr.mxu0 0.0
        %487 = vmatpush1.msra.mxu0 0.0
        %488 = vmatprep.subr.mxu0 0.0
        %489 = vmatpush1.msra.mxu0 0.0
        %490 = vmatprep.subr.mxu0 0.0
        %491 = vmatpush1.msra.mxu0 0.0
        %492 = vmatprep.subr.mxu0 0.0
        %493 = vmatpush1.msra.mxu0 0.0
        %494 = vmatprep.subr.mxu0 0.0
        %495 = vmatpush1.msra.mxu0 0.0
        %496 = vmatprep.subr.mxu0 0.0
        %497 = vmatpush1.msra.mxu0 0.0
        %498 = vmatprep.subr.mxu0 0.0
        %499 = vmatpush1.msra.mxu0 0.0
        %500 = vmatprep.subr.mxu0 0.0
        %501 = vmatpush1.msra.mxu0 0.0
        %502 = vmatprep.subr.mxu0 0.0
        %503 = vmatpush1.msra.mxu0 0.0
        %504 = vmatprep.subr.mxu0 0.0
        %505 = vmatpush1.msra.mxu0 0.0
        %506 = vmatprep.subr.mxu0 0.0
        %507 = vmatpush1.msra.mxu0 0.0
        %508 = vmatprep.subr.mxu0 0.0
        %509 = vmatpush1.msra.mxu0 0.0
        %510 = vmatprep.subr.mxu0 0.0
        %511 = vmatpush1.msra.mxu0 0.0
        %512 = vmatprep.subr.mxu0 0.0
        %513 = vmatpush1.msra.mxu0 0.0
        %514 = vmatprep.subr.mxu0 0.0
        %515 = vmatpush1.msra.mxu0 0.0
        %516 = vmatprep.mubr.f32.mxu0 0.0
        %517 = vmatmul.mubr.f32.gmra.mrb[0].mxu0 %v325
        %v518 = vpop.f32.mrb[0].mxu0
        %v519 = vadd.f32 0.0, %v518
        %v520 = vpop.f32.mrb[0].mxu0
        %521 = vmatprep.mubr.f32.mxu0 0.0
        %522 = vmatmul.mubr.f32.gmra.mrb[0].mxu0 %v326
        %v523 = vpop.f32.mrb[0].mxu0
        %v524 = vadd.f32 0.0, %v523
        %v525 = vpop.f32.mrb[0].mxu0
        %526 = vdwg.mxu0
        %v527 = vld [vmem:[#allocation2] sm:$0xff]
        %528 = vst [vmem:[#allocation2] sm:$0xff] %v448
        %v529 = vlaneseq
        %v530 = vshrl.u32 %v529, 7
        %vm531 = vcmp.lt.s32.totalorder %v530, 6
        %v532 = vsel %vm531, 1, 0
        %vm533 = vcmp.eq.s32.totalorder %v532, 1
        %v534 = vsel %vm533, %v448, %v527
        %v535 = vrot.slane %v442, 6
        %v536 = vrot.slane %v534, 6
        %vm537 = vcmp.lt.s32.totalorder %v530, 2
        %v538 = vsel %vm537, %v535, %v536
        %v539 = vsel %vm537, %v536, %v535
        %v540 = vadd.f32 %v539, %v444
        %v541 = vadd.f32 %v538, %v450
        %v542 = vld [vmem:[%s2] sm:$0x1]
        %v544 = vlaneseq
        %v545 = vshrl.u32 %v544, 7
        %v546 = vsub.s32 0, %v545
        %v547 = vrot.slane %v542, %v546
        %v549 = vadd.f32 %v540, %v547
        %v550 = vadd.f32 %v541, %v547
        %v551 = vmax.f32 %v549, 0.0
        %v552 = vmax.f32 %v550, 0.0
        %v553 = vld [vmem:[#allocation9] sm:$0xff]
        %v554 = vld [vmem:[#allocation9 + $0x8] sm:$0xff]
        %v555 = vld [vmem:[#allocation9 + $0x10] sm:$0xff]
        %v556 = vld [vmem:[#allocation9 + $0x18] sm:$0xff]
        %v557 = vld [vmem:[#allocation9 + $0x20] sm:$0xff]
        %v558 = vld [vmem:[#allocation9 + $0x28] sm:$0xff]
        %v559 = vld [vmem:[#allocation9 + $0x30] sm:$0xff]
        %v560 = vld [vmem:[#allocation9 + $0x38] sm:$0xff]
        %v561 = vld [vmem:[#allocation9 + $0x40] sm:$0xff]
        %v562 = vld [vmem:[#allocation9 + $0x48] sm:$0xff]
        %v563 = vld [vmem:[#allocation9 + $0x50] sm:$0xff]
        %v564 = vld [vmem:[#allocation9 + $0x58] sm:$0xff]
        %v565 = vld [vmem:[#allocation9 + $0x60] sm:$0xff]
        %v566 = vld [vmem:[#allocation9 + $0x68] sm:$0xff]
        %v567 = vld [vmem:[#allocation9 + $0x70] sm:$0xff]
        %v568 = vld [vmem:[#allocation9 + $0x78] sm:$0xff]
        %v569 = vld [vmem:[#allocation9 + $0x80] sm:$0xff]
        %v570 = vld [vmem:[#allocation9 + $0x88] sm:$0xff]
        %v571 = vld [vmem:[#allocation9 + $0x90] sm:$0xff]
        %v572 = vld [vmem:[#allocation9 + $0x98] sm:$0xff]
        %v573 = vld [vmem:[#allocation9 + $0xa0] sm:$0xff]
        %v574 = vld [vmem:[#allocation9 + $0xa8] sm:$0xff]
        %v575 = vld [vmem:[#allocation9 + $0xb0] sm:$0xff]
        %v576 = vld [vmem:[#allocation9 + $0xb8] sm:$0xff]
        %v577 = vld [vmem:[#allocation9 + $0xc0] sm:$0xff]
        %v578 = vld [vmem:[#allocation9 + $0xc8] sm:$0xff]
        %v579 = vld [vmem:[#allocation9 + $0xd0] sm:$0xff]
        %v580 = vld [vmem:[#allocation9 + $0xd8] sm:$0xff]
        %v581 = vld [vmem:[#allocation9 + $0xe0] sm:$0xff]
        %v582 = vld [vmem:[#allocation9 + $0xe8] sm:$0xff]
        %v583 = vld [vmem:[#allocation9 + $0xf0] sm:$0xff]
        %v584 = vld [vmem:[#allocation9 + $0xf8] sm:$0xff]
        %585 = vmatprep.subr.mxu0 %v554
        %586 = vmatpush1.msra.mxu0 %v553
        %587 = vmatprep.subr.mxu0 %v556
        %588 = vmatpush1.msra.mxu0 %v555
        %589 = vmatprep.subr.mxu0 %v558
        %590 = vmatpush1.msra.mxu0 %v557
        %591 = vmatprep.subr.mxu0 %v560
        %592 = vmatpush1.msra.mxu0 %v559
        %593 = vmatprep.subr.mxu0 %v562
        %594 = vmatpush1.msra.mxu0 %v561
        %595 = vmatprep.subr.mxu0 %v564
        %596 = vmatpush1.msra.mxu0 %v563
        %597 = vmatprep.subr.mxu0 %v566
        %598 = vmatpush1.msra.mxu0 %v565
        %599 = vmatprep.subr.mxu0 %v568
        %600 = vmatpush1.msra.mxu0 %v567
        %601 = vmatprep.subr.mxu0 %v570
        %602 = vmatpush1.msra.mxu0 %v569
        %603 = vmatprep.subr.mxu0 %v572
        %604 = vmatpush1.msra.mxu0 %v571
        %605 = vmatprep.subr.mxu0 %v574
        %606 = vmatpush1.msra.mxu0 %v573
        %607 = vmatprep.subr.mxu0 %v576
        %608 = vmatpush1.msra.mxu0 %v575
        %609 = vmatprep.subr.mxu0 %v578
        %610 = vmatpush1.msra.mxu0 %v577
        %611 = vmatprep.subr.mxu0 %v580
        %612 = vmatpush1.msra.mxu0 %v579
        %613 = vmatprep.subr.mxu0 %v582
        %614 = vmatpush1.msra.mxu0 %v581
        %615 = vmatprep.subr.mxu0 %v584
        %616 = vmatpush1.msra.mxu0 %v583
        %617 = vmatprep.subr.mxu0 0.0
        %618 = vmatpush1.msra.mxu0 0.0
        %619 = vmatprep.subr.mxu0 0.0
        %620 = vmatpush1.msra.mxu0 0.0
        %621 = vmatprep.subr.mxu0 0.0
        %622 = vmatpush1.msra.mxu0 0.0
        %623 = vmatprep.subr.mxu0 0.0
        %624 = vmatpush1.msra.mxu0 0.0
        %625 = vmatprep.subr.mxu0 0.0
        %626 = vmatpush1.msra.mxu0 0.0
        %627 = vmatprep.subr.mxu0 0.0
        %628 = vmatpush1.msra.mxu0 0.0
        %629 = vmatprep.subr.mxu0 0.0
        %630 = vmatpush1.msra.mxu0 0.0
        %631 = vmatprep.subr.mxu0 0.0
        %632 = vmatpush1.msra.mxu0 0.0
        %633 = vmatprep.subr.mxu0 0.0
        %634 = vmatpush1.msra.mxu0 0.0
        %635 = vmatprep.subr.mxu0 0.0
        %636 = vmatpush1.msra.mxu0 0.0
        %637 = vmatprep.subr.mxu0 0.0
        %638 = vmatpush1.msra.mxu0 0.0
        %639 = vmatprep.subr.mxu0 0.0
        %640 = vmatpush1.msra.mxu0 0.0
        %641 = vmatprep.subr.mxu0 0.0
        %642 = vmatpush1.msra.mxu0 0.0
        %643 = vmatprep.subr.mxu0 0.0
        %644 = vmatpush1.msra.mxu0 0.0
        %645 = vmatprep.subr.mxu0 0.0
        %646 = vmatpush1.msra.mxu0 0.0
        %647 = vmatprep.subr.mxu0 0.0
        %648 = vmatpush1.msra.mxu0 0.0
        %649 = vmatprep.mubr.f32.mxu0 0.0
        %650 = vmatmul.mubr.f32.gmra.mrb[0].mxu0 %v551
        %v651 = vpop.f32.mrb[0].mxu0
        %v652 = vadd.f32 0.0, %v651
        %v653 = vpop.f32.mrb[0].mxu0
        %v654 = vadd.f32 0.0, %v653
        %655 = vmatprep.mubr.f32.mxu0 0.0
        %656 = vmatmul.mubr.f32.gmra.mrb[0].mxu0 %v552
        %v657 = vpop.f32.mrb[0].mxu0
        %v658 = vadd.f32 0.0, %v657
        %v659 = vpop.f32.mrb[0].mxu0
        %v660 = vadd.f32 0.0, %v659
        %661 = vdwg.mxu0
        %v662 = vld [vmem:[#allocation3] sm:$0xff]
        %663 = vst [vmem:[#allocation3] sm:$0xff] %v658
        %v664 = vsel %vm533, %v658, %v662
        %v665 = vrot.slane %v652, 6
        %v666 = vrot.slane %v664, 6
        %v667 = vsel %vm537, %v665, %v666
        %v668 = vsel %vm537, %v666, %v665
        %v669 = vadd.f32 %v668, %v654
        %v670 = vadd.f32 %v667, %v660
        %v671 = vld [vmem:[%s4] sm:$0x1]
        %v673 = vlaneseq
        %v674 = vshrl.u32 %v673, 7
        %v675 = vsub.s32 0, %v674
        %v676 = vrot.slane %v671, %v675
        %v678 = vadd.f32 %v669, %v676
        %v679 = vadd.f32 %v670, %v676
        %v680 = vmax.f32 %v678, 0.0
        %v681 = vmax.f32 %v679, 0.0
        %v682 = vld [vmem:[%s5] sm:$0x1]
        %v684 = vlaneseq
        %v685 = vshrl.u32 %v684, 7
        %v686 = vsub.s32 0, %v685
        %v687 = vrot.slane %v682, %v686
        %v689 = vadd.f32 %v519, %v687
        %v690 = vadd.f32 %v524, %v687
        %v691 = vadd.f32 %v680, %v689
        %v692 = vadd.f32 %v681, %v690
        %v693 = vmax.f32 %v691, 0.0
        %v694 = vmax.f32 %v692, 0.0
        %695 = vst [vmem:[%s316] sm:$0xff] %v693
        %696 = vst [vmem:[%s316 + $0x8] sm:$0xff] %v694
        %s697 = sand.u32 %s179, 1
        %s698 = scalar_lea.sflag [#allocation6], %s697
        %s699 = sand.u32 %s179, 1
        %s700 = smul.addr %s699, 16
        %s701 = scalar_lea.vmem [#allocation10], %s700
        // Predicated region
        $region61: #{tpu_custom_call.1} parent=43 // pred_check
          %p702 = pneg %p189
        $region62: #{tpu_custom_call.1} parent=43 // pred_check_branch
          %704 = sbr.rel (%p702) target = $region64
        $region63: #{tpu_custom_call.1} parent=43 // pred_region
          %s705 = smul.u32 2, %s29
          %s707 = ssub.s32 256, 256
          %708 = vsyncadd %s698, %s707
          %s709 = smul.addr %s28, 2
          %s710 = sadd.s32 %s705, %s709
          %s711 = smul.addr %s710, 128
          %s712 = scalar_lea.hbm %s6, %s711
          %s713 = sshll.u32 %s701, 4
          %s714 = int_to_ptr.vmem [resolvable:$true] %s713
          %719 = dma.vmem_to_hbm [thread:$0]  %s714, 256, %s712, %s698, 128, 128, 8
        $region64: #{tpu_custom_call.1} parent=43 // pred_fallthru
          _
      $region44: #{tpu_custom_call.1} parent=5 // pred_fallthru
        _
      %p720 = scmp.le.s32.totalorder 2, %s19
      // Predicated region
      $region65: #{tpu_custom_call.1} parent=5 // pred_check
        %p721 = pneg %p720
      $region66: #{tpu_custom_call.1} parent=5 // pred_check_branch
        %723 = sbr.rel (%p721) target = $region68
      $region67: #{tpu_custom_call.1} parent=5 // pred_region
        %s724 = ssub.s32 %s19, 2
        // Predicated region
        $region69: #{tpu_custom_call.1} parent=67 // pred_check
          %p725 = pneg %p195
        $region70: #{tpu_custom_call.1} parent=67 // pred_check_branch
          %727 = sbr.rel (%p725) target = $region72
        $region71: #{tpu_custom_call.1} parent=67 // pred_region
          %s728 = sand.u32 %s180, 1
          %s729 = scalar_lea.sflag [#allocation6], %s728
          %s730 = sand.u32 %s180, 1
          %s731 = smul.addr %s730, 16
          %s732 = scalar_lea.vmem [#allocation10], %s731
          %733 = dma.done %s729, 256
        $region72: #{tpu_custom_call.1} parent=67 // pred_fallthru
          _
      $region68: #{tpu_custom_call.1} parent=5 // pred_fallthru
        _
    $region6: #{tpu_custom_call.1} parent=1 // loop_footer
      %s23 = sadd.s32 1, %s19
    $region7: #{tpu_custom_call.1} parent=1 // loop_footer_branch
      %18 = sbr.rel target = $region3
    $region8: #{tpu_custom_call.1} parent=1 // loop_exit
      _
    %734 = vsyncpa [#allocation5], 1
    %s735 = scalar_lea.sflag [#allocation5], 1
    %736 = vsyncpa %s735, 1
    %737 = vsyncpa [#allocation8], 1
    %738 = vsyncpa [#allocation6], 1
    %s739 = scalar_lea.sflag [#allocation6], 1
    %740 = vsyncpa %s739, 1

</llo_original>
